<compile_context>
chip_gen: v7x
topology: tpu7x:2x2x1
jax: 0.10.0
libtpu: 0.0.40
codegen_flags: <defaults>
</compile_context>

<pallas_src>
import functools

import jax
import jax.numpy as jnp
from jax.experimental import pallas as pl
from jax.experimental.pallas import tpu as pltpu

LANE = 128
# Scoped-VMEM request kept v7x-safe (64 MiB physical there vs 128 MiB on
# v5e/v6e); the working set at tile<=1024 is far below this on every gen.
VMEM_LIMIT_BYTES = 48 * 1024 * 1024


def _round_up(x, m):
    return (x + m - 1) // m * m


# ----------------------------- kernel helpers -----------------------------
def _gelu_exact(x):
    # PyTorch F.gelu default ('none') = exact erf-based gelu.
    return 0.5 * x * (1.0 + jax.lax.erf(x * 0.7071067811865476))


def _layer_norm_masked(z, gamma, beta, true_dim, eps=1e-5):
    """LayerNorm over the last dim, counting only the first `true_dim` lanes.

    Padded lanes of z are exactly zero by construction; gamma/beta are padded
    with zeros so padded lanes of the output are zero as well.
    """
    lane = jax.lax.broadcasted_iota(jnp.int32, z.shape, dimension=z.ndim - 1)
    mask = lane < true_dim
    inv_d = 1.0 / float(true_dim)
    zm = jnp.where(mask, z, 0.0)
    mean = jnp.sum(zm, axis=-1, keepdims=True) * inv_d
    diff = jnp.where(mask, z - mean, 0.0)
    var = jnp.sum(diff * diff, axis=-1, keepdims=True) * inv_d
    return (z - mean) * jax.lax.rsqrt(var + eps) * gamma + beta


# ------------------------------- kernels -----------------------------------
def encoder_kernel(x_ref, w1_ref, b1_ref, g1_ref, be1_ref, h0_ref, *, h_true):
    """h0 = LN1(gelu(x @ W1 + b1)) for one row tile; emitted in bf16."""
    z = jnp.dot(x_ref[...], w1_ref[...], preferred_element_type=jnp.float32)
    z = z + b1_ref[...]
    z = _gelu_exact(z)
    h0_ref[...] = _layer_norm_masked(
        z, g1_ref[...], be1_ref[...], h_true).astype(h0_ref.dtype)


def prop_mid_kernel(a_ref, h_ref, h0_ref, out_ref, acc_ref, *, alpha, tile):
    """One non-final APPNP step.

    Grid: (row tile i, contraction tile k).  h_ref is the FULL bf16 h array,
    VMEM-resident for the whole call; the kernel slices the contraction block.
    """
    k = pl.program_id(1)

    @pl.when(k == 0)
    def _init():
        acc_ref[...] = jnp.zeros_like(acc_ref)

    start = pl.multiple_of(k * tile, tile)
    acc_ref[...] += jnp.dot(a_ref[...], h_ref[pl.ds(start, tile), :],
                            preferred_element_type=jnp.float32)

    @pl.when(k == pl.num_programs(1) - 1)
    def _finalize():
        h_new = ((1.0 - alpha) * acc_ref[...]
                 + alpha * h0_ref[...].astype(jnp.float32))
        out_ref[...] = h_new.astype(out_ref.dtype)


def prop_last_kernel(a_ref, h_ref, h0_ref, g2_ref, be2_ref, w2_ref, b2_ref,
                     out_ref, acc_ref, *, alpha, h_true, tile):
    """Final APPNP step with the decoder fused: out = LN2(gelu(h_new)) @ W2 + b2."""
    k = pl.program_id(1)

    @pl.when(k == 0)
    def _init():
        acc_ref[...] = jnp.zeros_like(acc_ref)

    start = pl.multiple_of(k * tile, tile)
    acc_ref[...] += jnp.dot(a_ref[...], h_ref[pl.ds(start, tile), :],
                            preferred_element_type=jnp.float32)

    @pl.when(k == pl.num_programs(1) - 1)
    def _finalize():
        h_new = ((1.0 - alpha) * acc_ref[...]
                 + alpha * h0_ref[...].astype(jnp.float32))
        g = _gelu_exact(h_new)
        ln = _layer_norm_masked(g, g2_ref[...], be2_ref[...], h_true)
        out_ref[...] = (
            jnp.dot(ln, w2_ref[...], preferred_element_type=jnp.float32)
            + b2_ref[...])


# ------------------------------- glue (JAX) --------------------------------
def gcn_norm_dense(edge_index, num_nodes, edge_weight=None):
    """Dense A_hat = D^-1/2 (A + I) D^-1/2 with A[dst, src] = edge weight.

    Self loops (weight 1) are only added for nodes that do not already have
    one (add_remaining_self_loops semantics).
    """
    src = edge_index[0]
    dst = edge_index[1]
    if edge_weight is None:
        edge_weight = jnp.ones(src.shape, dtype=jnp.float32)
    a = jnp.zeros((num_nodes, num_nodes), jnp.float32).at[dst, src].add(edge_weight)
    diag = jnp.diagonal(a)
    a = a + jnp.diag(jnp.where(diag == 0.0, 1.0, 0.0))
    deg = a.sum(axis=1)                                  # in-degree (target)
    d_inv_sqrt = jnp.where(deg > 0.0, 1.0 / jnp.sqrt(deg), 0.0)
    return d_inv_sqrt[:, None] * a * d_inv_sqrt[None, :]


def appnp_net_lr_forward(x, edge_index, params, *, K=2, alpha=0.5,
                         edge_weight=None, tile=1024):
    assert K >= 1
    n, cin = x.shape
    hid = params["w1"].shape[1]
    cout = params["w2"].shape[1]
    f32 = jnp.float32
    bf16 = jnp.bfloat16

    # Lane-dense padding of the channel dims; node dim padded to the tile.
    cin_pad = _round_up(cin, LANE)
    h_pad = _round_up(hid, LANE)
    c_pad = _round_up(cout, LANE)
    tile = min(tile, _round_up(n, LANE))
    tile = _round_up(tile, LANE)
    n_pad = _round_up(n, tile)
    n_row = n_pad // tile
    n_k = n_pad // tile

    # TODO(synk): for genuinely sparse graphs replace this dense O(N^2) A_hat
    # with a scalar-prefetch / gather SpMM (PrefetchScalarGridSpec).
    a_hat = gcn_norm_dense(edge_index, n, edge_weight)
    # Built directly in bf16 (no padded f32 temp in HBM).
    a_pad = jnp.zeros((n_pad, n_pad), bf16).at[:n, :n].set(a_hat.astype(bf16))
    x_pad = jnp.zeros((n_pad, cin_pad), f32).at[:n, :cin].set(x.astype(f32))

    def pad2(p, r, c):
        return jnp.zeros((r, c), f32).at[:p.shape[0], :p.shape[1]].set(p.astype(f32))

    w1p = pad2(params["w1"], cin_pad, h_pad)
    b1p = pad2(params["b1"], 1, h_pad)
    g1p = pad2(params["g1"], 1, h_pad)      # padded lanes -> gamma = 0
    be1p = pad2(params["be1"], 1, h_pad)
    g2p = pad2(params["g2"], 1, h_pad)
    be2p = pad2(params["be2"], 1, h_pad)
    w2p = pad2(params["w2"], h_pad, c_pad)
    b2p = pad2(params["b2"], 1, c_pad)

    # ---- encoder: h0 = LN1(gelu(x @ W1 + b1)), tiled over node rows --------
    h0 = pl.pallas_call(
        functools.partial(encoder_kernel, h_true=hid),
        out_shape=jax.ShapeDtypeStruct((n_pad, h_pad), bf16),
        grid=(n_row,),
        in_specs=[
            pl.BlockSpec((tile, cin_pad), lambda i: (i, 0)),
            pl.BlockSpec((cin_pad, h_pad), lambda i: (0, 0)),
            pl.BlockSpec((1, h_pad), lambda i: (0, 0)),
            pl.BlockSpec((1, h_pad), lambda i: (0, 0)),
            pl.BlockSpec((1, h_pad), lambda i: (0, 0)),
        ],
        out_specs=pl.BlockSpec((tile, h_pad), lambda i: (i, 0)),
        compiler_params=pltpu.CompilerParams(
            dimension_semantics=("parallel",),
            vmem_limit_bytes=VMEM_LIMIT_BYTES),
    )(x_pad, w1p, b1p, g1p, be1p)

    # ---- K APPNP propagation steps (decoder fused into the last one) ------
    a_spec = pl.BlockSpec((tile, tile), lambda i, k: (i, k))     # A_hat tile
    h_spec = pl.BlockSpec((n_pad, h_pad), lambda i, k: (0, 0))   # h VMEM-resident
    h0_spec = pl.BlockSpec((tile, h_pad), lambda i, k: (i, 0))   # teleport term

    def make_cost(last_step):
        out_lane = c_pad if last_step else h_pad
        flops = 2 * n_pad * n_pad * h_pad
        if last_step:
            flops += 2 * n_pad * h_pad * c_pad
        bytes_accessed = (
            n_pad * n_pad * 2                          # A_hat (bf16)
            + n_pad * h_pad * 2                        # resident h (bf16), once
            + n_pad * h_pad * 2                        # h0 (bf16)
            + n_pad * out_lane * (4 if last_step else 2))
        return pl.CostEstimate(
            flops=int(flops),
            transcendentals=int(n_pad * h_pad if last_step else 0),
            bytes_accessed=int(bytes_accessed))

    prop_mid = pl.pallas_call(
        functools.partial(prop_mid_kernel, alpha=float(alpha), tile=tile),
        out_shape=jax.ShapeDtypeStruct((n_pad, h_pad), bf16),
        grid=(n_row, n_k),
        in_specs=[a_spec, h_spec, h0_spec],
        out_specs=pl.BlockSpec((tile, h_pad), lambda i, k: (i, 0)),
        scratch_shapes=[pltpu.VMEM((tile, h_pad), jnp.float32)],
        compiler_params=pltpu.CompilerParams(
            dimension_semantics=("parallel", "arbitrary"),
            vmem_limit_bytes=VMEM_LIMIT_BYTES),
        cost_estimate=make_cost(False),
    )

    prop_last = pl.pallas_call(
        functools.partial(prop_last_kernel, alpha=float(alpha), h_true=hid,
                          tile=tile),
        out_shape=jax.ShapeDtypeStruct((n_pad, c_pad), f32),
        grid=(n_row, n_k),
        in_specs=[
            a_spec, h_spec, h0_spec,
            pl.BlockSpec((1, h_pad), lambda i, k: (0, 0)),       # LN2 gamma
            pl.BlockSpec((1, h_pad), lambda i, k: (0, 0)),       # LN2 beta
            pl.BlockSpec((h_pad, c_pad), lambda i, k: (0, 0)),   # W2
            pl.BlockSpec((1, c_pad), lambda i, k: (0, 0)),       # b2
        ],
        out_specs=pl.BlockSpec((tile, c_pad), lambda i, k: (i, 0)),
        scratch_shapes=[pltpu.VMEM((tile, h_pad), jnp.float32)],
        compiler_params=pltpu.CompilerParams(
            dimension_semantics=("parallel", "arbitrary"),
            vmem_limit_bytes=VMEM_LIMIT_BYTES),
        cost_estimate=make_cost(True),
    )

    # TODO(synk): when n_pad^2 * 2B fits comfortably in VMEM, fuse the K steps
    # into one pallas_call with A_hat resident (needs h ping-pong in
    # VMEM_SHARED/CMEM to keep the row axis parallel on v7x's two TCs);
    # kept as K separate calls here so the row-tile axis stays "parallel".
    h = h0
    for step in range(K):
        if step == K - 1:
            h = prop_last(a_pad, h, h0, g2p, be2p, w2p, b2p)
        else:
            h = prop_mid(a_pad, h, h0)

    # Slice off node and lane padding.
    return h[:n, :cout]


# ------------------------- pure-JAX reference ------------------------------
def appnp_net_lr_reference(x, edge_index, params, *, K=2, alpha=0.5,
                           edge_weight=None):
    a_hat = gcn_norm_dense(edge_index, x.shape[0], edge_weight)

    def ln(z, g, b, eps=1e-5):
        m = z.mean(-1, keepdims=True)
        v = ((z - m) ** 2).mean(-1, keepdims=True)
        return (z - m) * jax.lax.rsqrt(v + eps) * g + b

    h = _gelu_exact(x @ params["w1"] + params["b1"])
    h = ln(h, params["g1"], params["be1"])
    h0 = h
    for _ in range(K):
        h = (1.0 - alpha) * (a_hat @ h) + alpha * h0
    h = _gelu_exact(h)
    h = ln(h, params["g2"], params["be2"])
    return h @ params["w2"] + params["b2"]


def init_params(key, in_channels, num_hid, out_channels):
    """Deterministic synthetic init (PyTorch-Linear-style uniform bounds)."""
    k1, k2, k3, k4 = jax.random.split(key, 4)
    bound1 = 1.0 / jnp.sqrt(in_channels)
    bound2 = 1.0 / jnp.sqrt(num_hid)
    return {
        "w1": jax.random.uniform(k1, (in_channels, num_hid), jnp.float32,
                                 -bound1, bound1),
        "b1": jax.random.uniform(k2, (1, num_hid), jnp.float32, -bound1, bound1),
        "g1": jnp.ones((1, num_hid), jnp.float32),
        "be1": jnp.zeros((1, num_hid), jnp.float32),
        "g2": jnp.ones((1, num_hid), jnp.float32),
        "be2": jnp.zeros((1, num_hid), jnp.float32),
        "w2": jax.random.uniform(k3, (num_hid, out_channels), jnp.float32,
                                 -bound2, bound2),
        "b2": jax.random.uniform(k4, (1, out_channels), jnp.float32,
                                 -bound2, bound2),
    }


if __name__ == "__main__":
    N, IN_CH, NUM_HID, OUT_CH = 64, 8, 16, 4
    K, ALPHA = 2, 0.5

    key = jax.random.PRNGKey(0)
    k_x, k_p = jax.random.split(key)

    # Node features.
    x = jax.random.normal(k_x, (N, IN_CH), dtype=jnp.float32)

    # Undirected ring graph: edges i <-> i+1 (mod N); edge_index shape (2, 2N).
    idx = jnp.arange(N, dtype=jnp.int32)
    src = jnp.concatenate([idx, idx])
    dst = jnp.concatenate([(idx + 1) % N, (idx - 1) % N])
    edge_index = jnp.stack([src, dst], axis=0)

    params = init_params(k_p, IN_CH, NUM_HID, OUT_CH)

    out = appnp_net_lr_forward(x, edge_index, params, K=K, alpha=ALPHA)
    jax.block_until_ready(out)
    assert out.shape == (N, OUT_CH) and out.dtype == jnp.float32
    assert bool(jnp.all(jnp.isfinite(out)))

    # Loose check vs f32 pure-JAX reference (kernel streams A_hat/h in bf16).
    ref = appnp_net_lr_reference(x, edge_index, params, K=K, alpha=ALPHA)
    max_err = float(jnp.max(jnp.abs(out - ref)))
    assert max_err < 0.2, f"max abs err {max_err}"

    print("KERNEL_OK")
</pallas_src>

<mosaic_0001>
module attributes {stable_mosaic.version = 11 : i64} {
  func.func @encoder_kernel(%arg0: i32, %arg1: memref<128x128xf32, #tpu.memory_space<vmem>>, %arg2: memref<128x128xf32, #tpu.memory_space<vmem>>, %arg3: memref<1x128xf32, #tpu.memory_space<vmem>>, %arg4: memref<1x128xf32, #tpu.memory_space<vmem>>, %arg5: memref<1x128xf32, #tpu.memory_space<vmem>>, %arg6: memref<128x128xbf16, #tpu.memory_space<vmem>>) attributes {dimension_semantics = [#tpu.dimension_semantics<parallel>], iteration_bounds = array<i64: 1>, scalar_prefetch = 0 : i64, scratch_operands = 0 : i64, tpu.core_type = #tpu.core_type<tc>, window_params = [{transform_indices = @transform_0, window_bounds = array<i64: 128, 128>}, {pipeline_mode = #tpu.pipeline_mode<synchronous>, transform_indices = @transform_1, window_bounds = array<i64: 128, 128>}, {pipeline_mode = #tpu.pipeline_mode<synchronous>, transform_indices = @transform_2, window_bounds = array<i64: 1, 128>}, {pipeline_mode = #tpu.pipeline_mode<synchronous>, transform_indices = @transform_3, window_bounds = array<i64: 1, 128>}, {pipeline_mode = #tpu.pipeline_mode<synchronous>, transform_indices = @transform_4, window_bounds = array<i64: 1, 128>}, {transform_indices = @transform_5, window_bounds = array<i64: 128, 128>}]} {
    %c0 = arith.constant 0 : index
    %c0_0 = arith.constant 0 : index
    %0 = vector.load %arg1[%c0, %c0_0] : memref<128x128xf32, #tpu.memory_space<vmem>>, vector<128x128xf32>
    %c0_1 = arith.constant 0 : index
    %c0_2 = arith.constant 0 : index
    %1 = vector.load %arg2[%c0_1, %c0_2] : memref<128x128xf32, #tpu.memory_space<vmem>>, vector<128x128xf32>
    %cst = arith.constant dense<0.000000e+00> : vector<128x128xf32>
    %2 = tpu.matmul %0, %1, %cst {dimension_numbers = #tpu.dot_dimension_numbers<[1], [0], [0], [1], [0, 0, 1, 1], [], []>} : vector<128x128xf32>, vector<128x128xf32>, vector<128x128xf32> -> vector<128x128xf32>
    %c0_3 = arith.constant 0 : index
    %c0_4 = arith.constant 0 : index
    %3 = vector.load %arg3[%c0_3, %c0_4] : memref<1x128xf32, #tpu.memory_space<vmem>>, vector<1x128xf32>
    %4 = vector.broadcast %3 : vector<1x128xf32> to vector<128x128xf32>
    %5 = arith.addf %2, %4 : vector<128x128xf32>
    %cst_5 = arith.constant 5.000000e-01 : f32
    %6 = vector.broadcast %cst_5 : f32 to vector<128x128xf32>
    %7 = arith.mulf %6, %5 : vector<128x128xf32>
    %cst_6 = arith.constant 0.707106769 : f32
    %8 = vector.broadcast %cst_6 : f32 to vector<128x128xf32>
    %9 = arith.mulf %5, %8 : vector<128x128xf32>
    %10 = math.erf %9 : vector<128x128xf32>
    %cst_7 = arith.constant 1.000000e+00 : f32
    %11 = vector.broadcast %cst_7 : f32 to vector<128x128xf32>
    %12 = arith.addf %11, %10 : vector<128x128xf32>
    %13 = arith.mulf %7, %12 : vector<128x128xf32>
    %c0_8 = arith.constant 0 : index
    %c0_9 = arith.constant 0 : index
    %14 = vector.load %arg4[%c0_8, %c0_9] : memref<1x128xf32, #tpu.memory_space<vmem>>, vector<1x128xf32>
    %c0_10 = arith.constant 0 : index
    %c0_11 = arith.constant 0 : index
    %15 = vector.load %arg5[%c0_10, %c0_11] : memref<1x128xf32, #tpu.memory_space<vmem>>, vector<1x128xf32>
    %16 = tpu.iota {dimensions = array<i32: 1>} : vector<128x128xi32>
    %c16_i32 = arith.constant 16 : i32
    %17 = vector.broadcast %c16_i32 : i32 to vector<128x128xi32>
    %18 = arith.cmpi slt, %16, %17 : vector<128x128xi32>
    %cst_12 = arith.constant 0.000000e+00 : f32
    %19 = vector.broadcast %cst_12 : f32 to vector<128x128xf32>
    %20 = arith.select %18, %13, %19 : vector<128x128xi1>, vector<128x128xf32>
    %cst_13 = arith.constant dense<0.000000e+00> : vector<128xf32>
    %21 = vector.multi_reduction <add>, %20, %cst_13 [1] : vector<128x128xf32> to vector<128xf32>
    %22 = vector.shape_cast %21 : vector<128xf32> to vector<128x1xf32>
    %cst_14 = arith.constant 6.250000e-02 : f32
    %23 = vector.broadcast %cst_14 : f32 to vector<128x1xf32>
    %24 = arith.mulf %22, %23 : vector<128x1xf32>
    %25 = vector.broadcast %24 : vector<128x1xf32> to vector<128x128xf32>
    %26 = arith.subf %13, %25 : vector<128x128xf32>
    %cst_15 = arith.constant 0.000000e+00 : f32
    %27 = vector.broadcast %cst_15 : f32 to vector<128x128xf32>
    %28 = arith.select %18, %26, %27 : vector<128x128xi1>, vector<128x128xf32>
    %29 = arith.mulf %28, %28 : vector<128x128xf32>
    %cst_16 = arith.constant dense<0.000000e+00> : vector<128xf32>
    %30 = vector.multi_reduction <add>, %29, %cst_16 [1] : vector<128x128xf32> to vector<128xf32>
    %31 = vector.shape_cast %30 : vector<128xf32> to vector<128x1xf32>
    %cst_17 = arith.constant 6.250000e-02 : f32
    %32 = vector.broadcast %cst_17 : f32 to vector<128x1xf32>
    %33 = arith.mulf %31, %32 : vector<128x1xf32>
    %34 = vector.broadcast %24 : vector<128x1xf32> to vector<128x128xf32>
    %35 = arith.subf %13, %34 : vector<128x128xf32>
    %cst_18 = arith.constant 9.99999974E-6 : f32
    %36 = vector.broadcast %cst_18 : f32 to vector<128x1xf32>
    %37 = arith.addf %33, %36 : vector<128x1xf32>
    %38 = math.rsqrt %37 : vector<128x1xf32>
    %39 = vector.broadcast %38 : vector<128x1xf32> to vector<128x128xf32>
    %40 = arith.mulf %35, %39 : vector<128x128xf32>
    %41 = vector.broadcast %14 : vector<1x128xf32> to vector<128x128xf32>
    %42 = arith.mulf %40, %41 : vector<128x128xf32>
    %43 = vector.broadcast %15 : vector<1x128xf32> to vector<128x128xf32>
    %44 = arith.addf %42, %43 : vector<128x128xf32>
    %45 = arith.truncf %44 : vector<128x128xf32> to vector<128x128xbf16>
    %c0_19 = arith.constant 0 : index
    %c0_20 = arith.constant 0 : index
    %46 = vector.load %arg6[%c0_19, %c0_20] : memref<128x128xbf16, #tpu.memory_space<vmem>>, vector<128x128xbf16>
    tpu.vector_store %arg6[%c0_19, %c0_20], %45 {strides = array<i32>} : memref<128x128xbf16, #tpu.memory_space<vmem>>, vector<128x128xbf16>,
    return
  }
  func.func @transform_0(%arg0: i32) -> (i32, i32) {
    %c0_i32 = arith.constant 0 : i32
    %c0_i32_0 = arith.constant 0 : i32
    return %arg0, %c0_i32 : i32, i32
  }
  func.func @transform_1(%arg0: i32) -> (i32, i32) {
    %c0_i32 = arith.constant 0 : i32
    %c0_i32_0 = arith.constant 0 : i32
    %c0_i32_1 = arith.constant 0 : i32
    return %c0_i32, %c0_i32_0 : i32, i32
  }
  func.func @transform_2(%arg0: i32) -> (i32, i32) {
    %c0_i32 = arith.constant 0 : i32
    %c0_i32_0 = arith.constant 0 : i32
    %c0_i32_1 = arith.constant 0 : i32
    return %c0_i32, %c0_i32_0 : i32, i32
  }
  func.func @transform_3(%arg0: i32) -> (i32, i32) {
    %c0_i32 = arith.constant 0 : i32
    %c0_i32_0 = arith.constant 0 : i32
    %c0_i32_1 = arith.constant 0 : i32
    return %c0_i32, %c0_i32_0 : i32, i32
  }
  func.func @transform_4(%arg0: i32) -> (i32, i32) {
    %c0_i32 = arith.constant 0 : i32
    %c0_i32_0 = arith.constant 0 : i32
    %c0_i32_1 = arith.constant 0 : i32
    return %c0_i32, %c0_i32_0 : i32, i32
  }
  func.func @transform_5(%arg0: i32) -> (i32, i32) {
    %c0_i32 = arith.constant 0 : i32
    %c0_i32_0 = arith.constant 0 : i32
    return %arg0, %c0_i32 : i32, i32
  }
}

</mosaic_0001>

<llo_original>
// kernel: tpu_custom_call.1
$region0: #{tpu_custom_call.1}
  #allocation0 [shape = 'u32[]', space=smem, size = 0x4, offset = 0x4, fixed_abs, tag = 'smem constant byte address 0x4 - core index']
  #allocation1 [shape = 'u32[144,128]{1,0:T(1,128)}', space=vmem, size = 0x12000, scoped, tag = 'internal scratch']
  %s0 = inlined_call_operand.hbm [shape: f32[128,128], index: 0, kind: input, shape index: {}]
  %s1 = inlined_call_operand.hbm [shape: f32[128,128], index: 1, kind: input, shape index: {}]
  %s2 = inlined_call_operand.vmem [shape: f32[1,128], index: 2, kind: input, shape index: {}]
  %s3 = inlined_call_operand.vmem [shape: f32[1,128], index: 3, kind: input, shape index: {}]
  %s4 = inlined_call_operand.vmem [shape: f32[1,128], index: 4, kind: input, shape index: {}]
  %s5 = inlined_call_operand.hbm [shape: bf16[128,128], index: 5, kind: output, shape index: {}]
  %s6 = sld [smem:[#allocation0]]
  $region38: #{tpu_custom_call.1} parent=0
    _
  %s8 = ssub.s32 1, %s6
  %s9 = scalar_select 0, %s8, %s6
  $region1: #{tpu_custom_call.1} parent=0
    #allocation2 [shape = 'u8[65536]{0}', space=vmem, size = 0x10000, scoped, tag = 'input window, operand 0, single buffered']
    #allocation3 [shape = 's32[1]{0}', space=sflag, size = 0x4, scoped, tag = 'scoped memory for tpu_custom_call.1']
    #allocation4 [shape = 's32[1]{0}', space=sflag, size = 0x4, scoped, tag = 'scoped memory for tpu_custom_call.1']
    #allocation5 [shape = 'u8[65536]{0}', space=vmem, size = 0x10000, scoped, tag = 'input window, operand 1, single buffered']
    #allocation6 [shape = 's32[1]{0}', space=sflag, size = 0x4, scoped, tag = 'scoped memory for tpu_custom_call.1']
    #allocation7 [shape = 'u8[32768]{0}', space=vmem, size = 0x8000, scoped, tag = 'output window, operand 0, single buffered']
    %10 = vsyncpa [#allocation3], 0
    %11 = vsyncpa [#allocation6], 0
    %12 = vsyncpa [#allocation4], 0
    // Predicated region
    $region2: #{tpu_custom_call.1} parent=1 // pred_check
      _
    $region3: #{tpu_custom_call.1} parent=1 // pred_check_branch
      %14 = sbr.rel (0) target = $region5
    $region4: #{tpu_custom_call.1} parent=1 // pred_region
      %s16 = ssub.s32 2048, 2048
      %17 = vsyncadd [#allocation3], %s16
      %s18 = sshll.u32 [#allocation2], 4
      %s19 = int_to_ptr.vmem [resolvable:$true] %s18
      %24 = dma.hbm_to_vmem [thread:$0]  %s0, 2048, %s19, [#allocation3], 128, 128, 8
    $region5: #{tpu_custom_call.1} parent=1 // pred_fallthru
      _
    // Predicated region
    $region6: #{tpu_custom_call.1} parent=1 // pred_check
      _
    $region7: #{tpu_custom_call.1} parent=1 // pred_check_branch
      %26 = sbr.rel (0) target = $region9
    $region8: #{tpu_custom_call.1} parent=1 // pred_region
      %s28 = ssub.s32 2048, 2048
      %29 = vsyncadd [#allocation6], %s28
      %s30 = sshll.u32 [#allocation5], 4
      %s31 = int_to_ptr.vmem [resolvable:$true] %s30
      %36 = dma.hbm_to_vmem [thread:$0]  %s1, 2048, %s31, [#allocation6], 128, 128, 8
    $region9: #{tpu_custom_call.1} parent=1 // pred_fallthru
      _
    // Predicated region
    $region10: #{tpu_custom_call.1} parent=1 // pred_check
      _
    $region11: #{tpu_custom_call.1} parent=1 // pred_check_branch
      %38 = sbr.rel (0) target = $region13
    $region12: #{tpu_custom_call.1} parent=1 // pred_region
      _
    $region13: #{tpu_custom_call.1} parent=1 // pred_fallthru
      _
    // Predicated region
    $region14: #{tpu_custom_call.1} parent=1 // pred_check
      _
    $region15: #{tpu_custom_call.1} parent=1 // pred_check_branch
      %40 = sbr.rel (0) target = $region17
    $region16: #{tpu_custom_call.1} parent=1 // pred_region
      _
    $region17: #{tpu_custom_call.1} parent=1 // pred_fallthru
      _
    // Predicated region
    $region18: #{tpu_custom_call.1} parent=1 // pred_check
      _
    $region19: #{tpu_custom_call.1} parent=1 // pred_check_branch
      %42 = sbr.rel (0) target = $region21
    $region20: #{tpu_custom_call.1} parent=1 // pred_region
      _
    $region21: #{tpu_custom_call.1} parent=1 // pred_fallthru
      _
    // Predicated region
    $region22: #{tpu_custom_call.1} parent=1 // pred_check
      _
    $region23: #{tpu_custom_call.1} parent=1 // pred_check_branch
      %44 = sbr.rel (0) target = $region25
    $region24: #{tpu_custom_call.1} parent=1 // pred_region
      %45 = dma.done [#allocation3], 2048
    $region25: #{tpu_custom_call.1} parent=1 // pred_fallthru
      _
    // Predicated region
    $region26: #{tpu_custom_call.1} parent=1 // pred_check
      _
    $region27: #{tpu_custom_call.1} parent=1 // pred_check_branch
      %47 = sbr.rel (0) target = $region29
    $region28: #{tpu_custom_call.1} parent=1 // pred_region
      %48 = dma.done [#allocation6], 2048
    $region29: #{tpu_custom_call.1} parent=1 // pred_fallthru
      _
    %v49 = vld [vmem:[#allocation2] sm:$0xff]
    %v50 = vld [vmem:[#allocation2 + $0x8] sm:$0xff]
    %v51 = vld [vmem:[#allocation2 + $0x10] sm:$0xff]
    %v52 = vld [vmem:[#allocation2 + $0x18] sm:$0xff]
    %v53 = vld [vmem:[#allocation2 + $0x20] sm:$0xff]
    %v54 = vld [vmem:[#allocation2 + $0x28] sm:$0xff]
    %v55 = vld [vmem:[#allocation2 + $0x30] sm:$0xff]
    %v56 = vld [vmem:[#allocation2 + $0x38] sm:$0xff]
    %v57 = vld [vmem:[#allocation2 + $0x40] sm:$0xff]
    %v58 = vld [vmem:[#allocation2 + $0x48] sm:$0xff]
    %v59 = vld [vmem:[#allocation2 + $0x50] sm:$0xff]
    %v60 = vld [vmem:[#allocation2 + $0x58] sm:$0xff]
    %v61 = vld [vmem:[#allocation2 + $0x60] sm:$0xff]
    %v62 = vld [vmem:[#allocation2 + $0x68] sm:$0xff]
    %v63 = vld [vmem:[#allocation2 + $0x70] sm:$0xff]
    %v64 = vld [vmem:[#allocation2 + $0x78] sm:$0xff]
    %v65 = vld [vmem:[#allocation5] sm:$0xff]
    %v66 = vld [vmem:[#allocation5 + $0x8] sm:$0xff]
    %v67 = vld [vmem:[#allocation5 + $0x10] sm:$0xff]
    %v68 = vld [vmem:[#allocation5 + $0x18] sm:$0xff]
    %v69 = vld [vmem:[#allocation5 + $0x20] sm:$0xff]
    %v70 = vld [vmem:[#allocation5 + $0x28] sm:$0xff]
    %v71 = vld [vmem:[#allocation5 + $0x30] sm:$0xff]
    %v72 = vld [vmem:[#allocation5 + $0x38] sm:$0xff]
    %v73 = vld [vmem:[#allocation5 + $0x40] sm:$0xff]
    %v74 = vld [vmem:[#allocation5 + $0x48] sm:$0xff]
    %v75 = vld [vmem:[#allocation5 + $0x50] sm:$0xff]
    %v76 = vld [vmem:[#allocation5 + $0x58] sm:$0xff]
    %v77 = vld [vmem:[#allocation5 + $0x60] sm:$0xff]
    %v78 = vld [vmem:[#allocation5 + $0x68] sm:$0xff]
    %v79 = vld [vmem:[#allocation5 + $0x70] sm:$0xff]
    %v80 = vld [vmem:[#allocation5 + $0x78] sm:$0xff]
    %v81 = vld [vmem:[%s2] sm:$0x1]
    %v83 = vlaneseq
    %v84 = vshrl.u32 %v83, 7
    %v85 = vsub.s32 0, %v84
    %v86 = vrot.slane %v81, %v85
    %88 = vmatprep.subr.mxu0 0.0
    %89 = vmatpush1.msra.mxu0 %v65
    %90 = vmatprep.subr.mxu0 0.0
    %91 = vmatpush1.msra.mxu0 %v66
    %92 = vmatprep.subr.mxu0 0.0
    %93 = vmatpush1.msra.mxu0 %v67
    %94 = vmatprep.subr.mxu0 0.0
    %95 = vmatpush1.msra.mxu0 %v68
    %96 = vmatprep.subr.mxu0 0.0
    %97 = vmatpush1.msra.mxu0 %v69
    %98 = vmatprep.subr.mxu0 0.0
    %99 = vmatpush1.msra.mxu0 %v70
    %100 = vmatprep.subr.mxu0 0.0
    %101 = vmatpush1.msra.mxu0 %v71
    %102 = vmatprep.subr.mxu0 0.0
    %103 = vmatpush1.msra.mxu0 %v72
    %104 = vmatprep.subr.mxu0 0.0
    %105 = vmatpush1.msra.mxu0 %v73
    %106 = vmatprep.subr.mxu0 0.0
    %107 = vmatpush1.msra.mxu0 %v74
    %108 = vmatprep.subr.mxu0 0.0
    %109 = vmatpush1.msra.mxu0 %v75
    %110 = vmatprep.subr.mxu0 0.0
    %111 = vmatpush1.msra.mxu0 %v76
    %112 = vmatprep.subr.mxu0 0.0
    %113 = vmatpush1.msra.mxu0 %v77
    %114 = vmatprep.subr.mxu0 0.0
    %115 = vmatpush1.msra.mxu0 %v78
    %116 = vmatprep.subr.mxu0 0.0
    %117 = vmatpush1.msra.mxu0 %v79
    %118 = vmatprep.subr.mxu0 0.0
    %119 = vmatpush1.msra.mxu0 %v80
    %120 = vmatprep.subr.mxu0 0.0
    %121 = vmatpush1.msra.mxu0 0.0
    %122 = vmatprep.subr.mxu0 0.0
    %123 = vmatpush1.msra.mxu0 0.0
    %124 = vmatprep.subr.mxu0 0.0
    %125 = vmatpush1.msra.mxu0 0.0
    %126 = vmatprep.subr.mxu0 0.0
    %127 = vmatpush1.msra.mxu0 0.0
    %128 = vmatprep.subr.mxu0 0.0
    %129 = vmatpush1.msra.mxu0 0.0
    %130 = vmatprep.subr.mxu0 0.0
    %131 = vmatpush1.msra.mxu0 0.0
    %132 = vmatprep.subr.mxu0 0.0
    %133 = vmatpush1.msra.mxu0 0.0
    %134 = vmatprep.subr.mxu0 0.0
    %135 = vmatpush1.msra.mxu0 0.0
    %136 = vmatprep.subr.mxu0 0.0
    %137 = vmatpush1.msra.mxu0 0.0
    %138 = vmatprep.subr.mxu0 0.0
    %139 = vmatpush1.msra.mxu0 0.0
    %140 = vmatprep.subr.mxu0 0.0
    %141 = vmatpush1.msra.mxu0 0.0
    %142 = vmatprep.subr.mxu0 0.0
    %143 = vmatpush1.msra.mxu0 0.0
    %144 = vmatprep.subr.mxu0 0.0
    %145 = vmatpush1.msra.mxu0 0.0
    %146 = vmatprep.subr.mxu0 0.0
    %147 = vmatpush1.msra.mxu0 0.0
    %148 = vmatprep.subr.mxu0 0.0
    %149 = vmatpush1.msra.mxu0 0.0
    %150 = vmatprep.subr.mxu0 0.0
    %151 = vmatpush1.msra.mxu0 0.0
    %152 = vmatprep.mubr.f32.mxu0 0.0
    %153 = vmatmul.mubr.f32.gmra.mrb[0].mxu0 %v49
    %v154 = vpop.f32.mrb[0].mxu0
    %v155 = vadd.f32 %v86, %v154
    %v156 = vpop.f32.mrb[0].mxu0
    %157 = vmatprep.mubr.f32.mxu0 0.0
    %158 = vmatmul.mubr.f32.gmra.mrb[0].mxu0 %v50
    %v159 = vpop.f32.mrb[0].mxu0
    %v160 = vadd.f32 %v86, %v159
    %v161 = vpop.f32.mrb[0].mxu0
    %162 = vmatprep.mubr.f32.mxu0 0.0
    %163 = vmatmul.mubr.f32.gmra.mrb[0].mxu0 %v51
    %v164 = vpop.f32.mrb[0].mxu0
    %v165 = vadd.f32 %v86, %v164
    %v166 = vpop.f32.mrb[0].mxu0
    %167 = vmatprep.mubr.f32.mxu0 0.0
    %168 = vmatmul.mubr.f32.gmra.mrb[0].mxu0 %v52
    %v169 = vpop.f32.mrb[0].mxu0
    %v170 = vadd.f32 %v86, %v169
    %v171 = vpop.f32.mrb[0].mxu0
    %172 = vmatprep.mubr.f32.mxu0 0.0
    %173 = vmatmul.mubr.f32.gmra.mrb[0].mxu0 %v53
    %v174 = vpop.f32.mrb[0].mxu0
    %v175 = vadd.f32 %v86, %v174
    %v176 = vpop.f32.mrb[0].mxu0
    %177 = vmatprep.mubr.f32.mxu0 0.0
    %178 = vmatmul.mubr.f32.gmra.mrb[0].mxu0 %v54
    %v179 = vpop.f32.mrb[0].mxu0
    %v180 = vadd.f32 %v86, %v179
    %v181 = vpop.f32.mrb[0].mxu0
    %182 = vmatprep.mubr.f32.mxu0 0.0
    %183 = vmatmul.mubr.f32.gmra.mrb[0].mxu0 %v55
    %v184 = vpop.f32.mrb[0].mxu0
    %v185 = vadd.f32 %v86, %v184
    %v186 = vpop.f32.mrb[0].mxu0
    %187 = vmatprep.mubr.f32.mxu0 0.0
    %188 = vmatmul.mubr.f32.gmra.mrb[0].mxu0 %v56
    %v189 = vpop.f32.mrb[0].mxu0
    %v190 = vadd.f32 %v86, %v189
    %v191 = vpop.f32.mrb[0].mxu0
    %192 = vmatprep.mubr.f32.mxu0 0.0
    %193 = vmatmul.mubr.f32.gmra.mrb[0].mxu0 %v57
    %v194 = vpop.f32.mrb[0].mxu0
    %v195 = vadd.f32 %v86, %v194
    %v196 = vpop.f32.mrb[0].mxu0
    %197 = vmatprep.mubr.f32.mxu0 0.0
    %198 = vmatmul.mubr.f32.gmra.mrb[0].mxu0 %v58
    %v199 = vpop.f32.mrb[0].mxu0
    %v200 = vadd.f32 %v86, %v199
    %v201 = vpop.f32.mrb[0].mxu0
    %202 = vmatprep.mubr.f32.mxu0 0.0
    %203 = vmatmul.mubr.f32.gmra.mrb[0].mxu0 %v59
    %v204 = vpop.f32.mrb[0].mxu0
    %v205 = vadd.f32 %v86, %v204
    %v206 = vpop.f32.mrb[0].mxu0
    %207 = vmatprep.mubr.f32.mxu0 0.0
    %208 = vmatmul.mubr.f32.gmra.mrb[0].mxu0 %v60
    %v209 = vpop.f32.mrb[0].mxu0
    %v210 = vadd.f32 %v86, %v209
    %v211 = vpop.f32.mrb[0].mxu0
    %212 = vmatprep.mubr.f32.mxu0 0.0
    %213 = vmatmul.mubr.f32.gmra.mrb[0].mxu0 %v61
    %v214 = vpop.f32.mrb[0].mxu0
    %v215 = vadd.f32 %v86, %v214
    %v216 = vpop.f32.mrb[0].mxu0
    %217 = vmatprep.mubr.f32.mxu0 0.0
    %218 = vmatmul.mubr.f32.gmra.mrb[0].mxu0 %v62
    %v219 = vpop.f32.mrb[0].mxu0
    %v220 = vadd.f32 %v86, %v219
    %v221 = vpop.f32.mrb[0].mxu0
    %222 = vmatprep.mubr.f32.mxu0 0.0
    %223 = vmatmul.mubr.f32.gmra.mrb[0].mxu0 %v63
    %v224 = vpop.f32.mrb[0].mxu0
    %v225 = vadd.f32 %v86, %v224
    %v226 = vpop.f32.mrb[0].mxu0
    %227 = vmatprep.mubr.f32.mxu0 0.0
    %228 = vmatmul.mubr.f32.gmra.mrb[0].mxu0 %v64
    %v229 = vpop.f32.mrb[0].mxu0
    %v230 = vadd.f32 %v86, %v229
    %v231 = vpop.f32.mrb[0].mxu0
    %232 = vdwg.mxu0
    %v233 = vmul.f32 %v155, 0.5
    %v234 = vmul.f32 %v160, 0.5
    %v235 = vmul.f32 %v165, 0.5
    %v236 = vmul.f32 %v170, 0.5
    %v237 = vmul.f32 %v175, 0.5
    %v238 = vmul.f32 %v180, 0.5
    %v239 = vmul.f32 %v185, 0.5
    %v240 = vmul.f32 %v190, 0.5
    %v241 = vmul.f32 %v195, 0.5
    %v242 = vmul.f32 %v200, 0.5
    %v243 = vmul.f32 %v205, 0.5
    %v244 = vmul.f32 %v210, 0.5
    %v245 = vmul.f32 %v215, 0.5
    %v246 = vmul.f32 %v220, 0.5
    %v247 = vmul.f32 %v225, 0.5
    %v248 = vmul.f32 %v230, 0.5
    %v249 = vmul.f32 %v155, 0.70710677
    %v250 = vmul.f32 %v160, 0.70710677
    %v251 = vmul.f32 %v165, 0.70710677
    %v252 = vmul.f32 %v170, 0.70710677
    %v253 = vmul.f32 %v175, 0.70710677
    %v254 = vmul.f32 %v180, 0.70710677
    %v255 = vmul.f32 %v185, 0.70710677
    %v256 = vmul.f32 %v190, 0.70710677
    %v257 = vmul.f32 %v195, 0.70710677
    %v258 = vmul.f32 %v200, 0.70710677
    %v259 = vmul.f32 %v205, 0.70710677
    %v260 = vmul.f32 %v210, 0.70710677
    %v261 = vmul.f32 %v215, 0.70710677
    %v262 = vmul.f32 %v220, 0.70710677
    %v263 = vmul.f32 %v225, 0.70710677
    %v264 = vmul.f32 %v230, 0.70710677
    %v265 = verf.f32.pop %v249
    %v266 = verf.f32.pop %v250
    %v267 = verf.f32.pop %v251
    %v268 = verf.f32.pop %v252
    %v269 = verf.f32.pop %v253
    %v270 = verf.f32.pop %v254
    %v271 = verf.f32.pop %v255
    %v272 = verf.f32.pop %v256
    %v273 = verf.f32.pop %v257
    %v274 = verf.f32.pop %v258
    %v275 = verf.f32.pop %v259
    %v276 = verf.f32.pop %v260
    %v277 = verf.f32.pop %v261
    %v278 = verf.f32.pop %v262
    %v279 = verf.f32.pop %v263
    %v280 = verf.f32.pop %v264
    %v281 = vadd.f32 %v265, 1.0
    %v282 = vadd.f32 %v266, 1.0
    %v283 = vadd.f32 %v267, 1.0
    %v284 = vadd.f32 %v268, 1.0
    %v285 = vadd.f32 %v269, 1.0
    %v286 = vadd.f32 %v270, 1.0
    %v287 = vadd.f32 %v271, 1.0
    %v288 = vadd.f32 %v272, 1.0
    %v289 = vadd.f32 %v273, 1.0
    %v290 = vadd.f32 %v274, 1.0
    %v291 = vadd.f32 %v275, 1.0
    %v292 = vadd.f32 %v276, 1.0
    %v293 = vadd.f32 %v277, 1.0
    %v294 = vadd.f32 %v278, 1.0
    %v295 = vadd.f32 %v279, 1.0
    %v296 = vadd.f32 %v280, 1.0
    %v297 = vmul.f32 %v233, %v281
    %v298 = vmul.f32 %v234, %v282
    %v299 = vmul.f32 %v235, %v283
    %v300 = vmul.f32 %v236, %v284
    %v301 = vmul.f32 %v237, %v285
    %v302 = vmul.f32 %v238, %v286
    %v303 = vmul.f32 %v239, %v287
    %v304 = vmul.f32 %v240, %v288
    %v305 = vmul.f32 %v241, %v289
    %v306 = vmul.f32 %v242, %v290
    %v307 = vmul.f32 %v243, %v291
    %v308 = vmul.f32 %v244, %v292
    %v309 = vmul.f32 %v245, %v293
    %v310 = vmul.f32 %v246, %v294
    %v311 = vmul.f32 %v247, %v295
    %v312 = vmul.f32 %v248, %v296
    %v313 = vld [vmem:[%s3] sm:$0x1]
    %v314 = vld [vmem:[%s4] sm:$0x1]
    %v315 = vlaneseq
    %v316 = vand.u32 %v315, 127
    %vm317 = vcmp.lt.s32.totalorder %v316, 16
    %v318 = vsel %vm317, %v297, 0.0
    %v319 = vsel %vm317, %v298, 0.0
    %v320 = vsel %vm317, %v299, 0.0
    %v321 = vsel %vm317, %v300, 0.0
    %v322 = vsel %vm317, %v301, 0.0
    %v323 = vsel %vm317, %v302, 0.0
    %v324 = vsel %vm317, %v303, 0.0
    %v325 = vsel %vm317, %v304, 0.0
    %v326 = vsel %vm317, %v305, 0.0
    %v327 = vsel %vm317, %v306, 0.0
    %v328 = vsel %vm317, %v307, 0.0
    %v329 = vsel %vm317, %v308, 0.0
    %v330 = vsel %vm317, %v309, 0.0
    %v331 = vsel %vm317, %v310, 0.0
    %v332 = vsel %vm317, %v311, 0.0
    %v333 = vsel %vm317, %v312, 0.0
    %334 = vadd.xlane.f32.xlu0 %v318
    %v335 = vpop.xlane.xlu0 %334
    %336 = vadd.xlane.f32.xlu0 %v319
    %v337 = vpop.xlane.xlu0 %336
    %338 = vadd.xlane.f32.xlu0 %v320
    %v339 = vpop.xlane.xlu0 %338
    %340 = vadd.xlane.f32.xlu0 %v321
    %v341 = vpop.xlane.xlu0 %340
    %342 = vadd.xlane.f32.xlu0 %v322
    %v343 = vpop.xlane.xlu0 %342
    %344 = vadd.xlane.f32.xlu0 %v323
    %v345 = vpop.xlane.xlu0 %344
    %346 = vadd.xlane.f32.xlu0 %v324
    %v347 = vpop.xlane.xlu0 %346
    %348 = vadd.xlane.f32.xlu0 %v325
    %v349 = vpop.xlane.xlu0 %348
    %350 = vadd.xlane.f32.xlu0 %v326
    %v351 = vpop.xlane.xlu0 %350
    %352 = vadd.xlane.f32.xlu0 %v327
    %v353 = vpop.xlane.xlu0 %352
    %354 = vadd.xlane.f32.xlu0 %v328
    %v355 = vpop.xlane.xlu0 %354
    %356 = vadd.xlane.f32.xlu0 %v329
    %v357 = vpop.xlane.xlu0 %356
    %358 = vadd.xlane.f32.xlu0 %v330
    %v359 = vpop.xlane.xlu0 %358
    %360 = vadd.xlane.f32.xlu0 %v331
    %v361 = vpop.xlane.xlu0 %360
    %362 = vadd.xlane.f32.xlu0 %v332
    %v363 = vpop.xlane.xlu0 %362
    %364 = vadd.xlane.f32.xlu0 %v333
    %v365 = vpop.xlane.xlu0 %364
    %v366 = vmul.f32 %v335, 0.0625
    %v367 = vmul.f32 %v337, 0.0625
    %v368 = vmul.f32 %v339, 0.0625
    %v369 = vmul.f32 %v341, 0.0625
    %v370 = vmul.f32 %v343, 0.0625
    %v371 = vmul.f32 %v345, 0.0625
    %v372 = vmul.f32 %v347, 0.0625
    %v373 = vmul.f32 %v349, 0.0625
    %v374 = vmul.f32 %v351, 0.0625
    %v375 = vmul.f32 %v353, 0.0625
    %v376 = vmul.f32 %v355, 0.0625
    %v377 = vmul.f32 %v357, 0.0625
    %v378 = vmul.f32 %v359, 0.0625
    %v379 = vmul.f32 %v361, 0.0625
    %v380 = vmul.f32 %v363, 0.0625
    %v381 = vmul.f32 %v365, 0.0625
    %v382 = vsub.f32 %v297, %v366
    %v383 = vsub.f32 %v298, %v367
    %v384 = vsub.f32 %v299, %v368
    %v385 = vsub.f32 %v300, %v369
    %v386 = vsub.f32 %v301, %v370
    %v387 = vsub.f32 %v302, %v371
    %v388 = vsub.f32 %v303, %v372
    %v389 = vsub.f32 %v304, %v373
    %v390 = vsub.f32 %v305, %v374
    %v391 = vsub.f32 %v306, %v375
    %v392 = vsub.f32 %v307, %v376
    %v393 = vsub.f32 %v308, %v377
    %v394 = vsub.f32 %v309, %v378
    %v395 = vsub.f32 %v310, %v379
    %v396 = vsub.f32 %v311, %v380
    %v397 = vsub.f32 %v312, %v381
    %v398 = vsel %vm317, %v382, 0.0
    %v399 = vsel %vm317, %v383, 0.0
    %v400 = vsel %vm317, %v384, 0.0
    %v401 = vsel %vm317, %v385, 0.0
    %v402 = vsel %vm317, %v386, 0.0
    %v403 = vsel %vm317, %v387, 0.0
    %v404 = vsel %vm317, %v388, 0.0
    %v405 = vsel %vm317, %v389, 0.0
    %v406 = vsel %vm317, %v390, 0.0
    %v407 = vsel %vm317, %v391, 0.0
    %v408 = vsel %vm317, %v392, 0.0
    %v409 = vsel %vm317, %v393, 0.0
    %v410 = vsel %vm317, %v394, 0.0
    %v411 = vsel %vm317, %v395, 0.0
    %v412 = vsel %vm317, %v396, 0.0
    %v413 = vsel %vm317, %v397, 0.0
    %v414 = vmul.f32 %v398, %v398
    %v415 = vmul.f32 %v399, %v399
    %v416 = vmul.f32 %v400, %v400
    %v417 = vmul.f32 %v401, %v401
    %v418 = vmul.f32 %v402, %v402
    %v419 = vmul.f32 %v403, %v403
    %v420 = vmul.f32 %v404, %v404
    %v421 = vmul.f32 %v405, %v405
    %v422 = vmul.f32 %v406, %v406
    %v423 = vmul.f32 %v407, %v407
    %v424 = vmul.f32 %v408, %v408
    %v425 = vmul.f32 %v409, %v409
    %v426 = vmul.f32 %v410, %v410
    %v427 = vmul.f32 %v411, %v411
    %v428 = vmul.f32 %v412, %v412
    %v429 = vmul.f32 %v413, %v413
    %430 = vadd.xlane.f32.xlu0 %v414
    %v431 = vpop.xlane.xlu0 %430
    %432 = vadd.xlane.f32.xlu0 %v415
    %v433 = vpop.xlane.xlu0 %432
    %434 = vadd.xlane.f32.xlu0 %v416
    %v435 = vpop.xlane.xlu0 %434
    %436 = vadd.xlane.f32.xlu0 %v417
    %v437 = vpop.xlane.xlu0 %436
    %438 = vadd.xlane.f32.xlu0 %v418
    %v439 = vpop.xlane.xlu0 %438
    %440 = vadd.xlane.f32.xlu0 %v419
    %v441 = vpop.xlane.xlu0 %440
    %442 = vadd.xlane.f32.xlu0 %v420
    %v443 = vpop.xlane.xlu0 %442
    %444 = vadd.xlane.f32.xlu0 %v421
    %v445 = vpop.xlane.xlu0 %444
    %446 = vadd.xlane.f32.xlu0 %v422
    %v447 = vpop.xlane.xlu0 %446
    %448 = vadd.xlane.f32.xlu0 %v423
    %v449 = vpop.xlane.xlu0 %448
    %450 = vadd.xlane.f32.xlu0 %v424
    %v451 = vpop.xlane.xlu0 %450
    %452 = vadd.xlane.f32.xlu0 %v425
    %v453 = vpop.xlane.xlu0 %452
    %454 = vadd.xlane.f32.xlu0 %v426
    %v455 = vpop.xlane.xlu0 %454
    %456 = vadd.xlane.f32.xlu0 %v427
    %v457 = vpop.xlane.xlu0 %456
    %458 = vadd.xlane.f32.xlu0 %v428
    %v459 = vpop.xlane.xlu0 %458
    %460 = vadd.xlane.f32.xlu0 %v429
    %v461 = vpop.xlane.xlu0 %460
    %v462 = vmul.f32 %v431, 0.0625
    %v463 = vmul.f32 %v433, 0.0625
    %v464 = vmul.f32 %v435, 0.0625
    %v465 = vmul.f32 %v437, 0.0625
    %v466 = vmul.f32 %v439, 0.0625
    %v467 = vmul.f32 %v441, 0.0625
    %v468 = vmul.f32 %v443, 0.0625
    %v469 = vmul.f32 %v445, 0.0625
    %v470 = vmul.f32 %v447, 0.0625
    %v471 = vmul.f32 %v449, 0.0625
    %v472 = vmul.f32 %v451, 0.0625
    %v473 = vmul.f32 %v453, 0.0625
    %v474 = vmul.f32 %v455, 0.0625
    %v475 = vmul.f32 %v457, 0.0625
    %v476 = vmul.f32 %v459, 0.0625
    %v477 = vmul.f32 %v461, 0.0625
    %v478 = vadd.f32 %v462, 1e-05
    %v479 = vadd.f32 %v463, 1e-05
    %v480 = vadd.f32 %v464, 1e-05
    %v481 = vadd.f32 %v465, 1e-05
    %v482 = vadd.f32 %v466, 1e-05
    %v483 = vadd.f32 %v467, 1e-05
    %v484 = vadd.f32 %v468, 1e-05
    %v485 = vadd.f32 %v469, 1e-05
    %v486 = vadd.f32 %v470, 1e-05
    %v487 = vadd.f32 %v471, 1e-05
    %v488 = vadd.f32 %v472, 1e-05
    %v489 = vadd.f32 %v473, 1e-05
    %v490 = vadd.f32 %v474, 1e-05
    %v491 = vadd.f32 %v475, 1e-05
    %v492 = vadd.f32 %v476, 1e-05
    %v493 = vadd.f32 %v477, 1e-05
    %v494 = vrsqrt.pop %v478
    %v495 = vrsqrt.pop %v479
    %v496 = vrsqrt.pop %v480
    %v497 = vrsqrt.pop %v481
    %v498 = vrsqrt.pop %v482
    %v499 = vrsqrt.pop %v483
    %v500 = vrsqrt.pop %v484
    %v501 = vrsqrt.pop %v485
    %v502 = vrsqrt.pop %v486
    %v503 = vrsqrt.pop %v487
    %v504 = vrsqrt.pop %v488
    %v505 = vrsqrt.pop %v489
    %v506 = vrsqrt.pop %v490
    %v507 = vrsqrt.pop %v491
    %v508 = vrsqrt.pop %v492
    %v509 = vrsqrt.pop %v493
    %v510 = vmul.f32 %v382, %v494
    %v511 = vmul.f32 %v383, %v495
    %v512 = vmul.f32 %v384, %v496
    %v513 = vmul.f32 %v385, %v497
    %v514 = vmul.f32 %v386, %v498
    %v515 = vmul.f32 %v387, %v499
    %v516 = vmul.f32 %v388, %v500
    %v517 = vmul.f32 %v389, %v501
    %v518 = vmul.f32 %v390, %v502
    %v519 = vmul.f32 %v391, %v503
    %v520 = vmul.f32 %v392, %v504
    %v521 = vmul.f32 %v393, %v505
    %v522 = vmul.f32 %v394, %v506
    %v523 = vmul.f32 %v395, %v507
    %v524 = vmul.f32 %v396, %v508
    %v525 = vmul.f32 %v397, %v509
    %v527 = vlaneseq
    %v528 = vshrl.u32 %v527, 7
    %v529 = vsub.s32 0, %v528
    %v530 = vrot.slane %v313, %v529
    %v532 = vmul.f32 %v510, %v530
    %v533 = vmul.f32 %v511, %v530
    %v534 = vmul.f32 %v512, %v530
    %v535 = vmul.f32 %v513, %v530
    %v536 = vmul.f32 %v514, %v530
    %v537 = vmul.f32 %v515, %v530
    %v538 = vmul.f32 %v516, %v530
    %v539 = vmul.f32 %v517, %v530
    %v540 = vmul.f32 %v518, %v530
    %v541 = vmul.f32 %v519, %v530
    %v542 = vmul.f32 %v520, %v530
    %v543 = vmul.f32 %v521, %v530
    %v544 = vmul.f32 %v522, %v530
    %v545 = vmul.f32 %v523, %v530
    %v546 = vmul.f32 %v524, %v530
    %v547 = vmul.f32 %v525, %v530
    %v549 = vlaneseq
    %v550 = vshrl.u32 %v549, 7
    %v551 = vsub.s32 0, %v550
    %v552 = vrot.slane %v314, %v551
    %v554 = vadd.f32 %v532, %v552
    %v555 = vadd.f32 %v533, %v552
    %v556 = vadd.f32 %v534, %v552
    %v557 = vadd.f32 %v535, %v552
    %v558 = vadd.f32 %v536, %v552
    %v559 = vadd.f32 %v537, %v552
    %v560 = vadd.f32 %v538, %v552
    %v561 = vadd.f32 %v539, %v552
    %v562 = vadd.f32 %v540, %v552
    %v563 = vadd.f32 %v541, %v552
    %v564 = vadd.f32 %v542, %v552
    %v565 = vadd.f32 %v543, %v552
    %v566 = vadd.f32 %v544, %v552
    %v567 = vadd.f32 %v545, %v552
    %v568 = vadd.f32 %v546, %v552
    %v569 = vadd.f32 %v547, %v552
    %v570 = vpack.c.bf16 %v555, %v554
    %v571 = vpack.c.bf16 %v557, %v556
    %v572 = vpack.c.bf16 %v559, %v558
    %v573 = vpack.c.bf16 %v561, %v560
    %v574 = vpack.c.bf16 %v563, %v562
    %v575 = vpack.c.bf16 %v565, %v564
    %v576 = vpack.c.bf16 %v567, %v566
    %v577 = vpack.c.bf16 %v569, %v568
    %v586 = vunpack.c.l.b16 %v570
    %v587 = vunpack.c.h.b16 %v570
    %v588 = vunpack.c.l.b16 %v571
    %v589 = vunpack.c.h.b16 %v571
    %v590 = vunpack.c.l.b16 %v572
    %v591 = vunpack.c.h.b16 %v572
    %v592 = vunpack.c.l.b16 %v573
    %v593 = vunpack.c.h.b16 %v573
    %v594 = vunpack.c.l.b16 %v574
    %v595 = vunpack.c.h.b16 %v574
    %v596 = vunpack.c.l.b16 %v575
    %v597 = vunpack.c.h.b16 %v575
    %v598 = vunpack.c.l.b16 %v576
    %v599 = vunpack.c.h.b16 %v576
    %v600 = vunpack.c.l.b16 %v577
    %v601 = vunpack.c.h.b16 %v577
    %v602 = vpack.c.b16 %v586, %v586
    %v603 = vpack.c.b16 %v587, %v587
    %v604 = vpack.c.b16 %v588, %v588
    %v605 = vpack.c.b16 %v589, %v589
    %v606 = vpack.c.b16 %v590, %v590
    %v607 = vpack.c.b16 %v591, %v591
    %v608 = vpack.c.b16 %v592, %v592
    %v609 = vpack.c.b16 %v593, %v593
    %v610 = vpack.c.b16 %v594, %v594
    %v611 = vpack.c.b16 %v595, %v595
    %v612 = vpack.c.b16 %v596, %v596
    %v613 = vpack.c.b16 %v597, %v597
    %v614 = vpack.c.b16 %v598, %v598
    %v615 = vpack.c.b16 %v599, %v599
    %v616 = vpack.c.b16 %v600, %v600
    %v617 = vpack.c.b16 %v601, %v601
    %634 = vst [vmem:[#allocation7] sm:$0xf] %v602
    %635 = vst [vmem:[#allocation7 + $0x4] sm:$0xf] %v603
    %636 = vst [vmem:[#allocation7 + $0x8] sm:$0xf] %v604
    %637 = vst [vmem:[#allocation7 + $0xc] sm:$0xf] %v605
    %638 = vst [vmem:[#allocation7 + $0x10] sm:$0xf] %v606
    %639 = vst [vmem:[#allocation7 + $0x14] sm:$0xf] %v607
    %640 = vst [vmem:[#allocation7 + $0x18] sm:$0xf] %v608
    %641 = vst [vmem:[#allocation7 + $0x1c] sm:$0xf] %v609
    %642 = vst [vmem:[#allocation7 + $0x20] sm:$0xf] %v610
    %643 = vst [vmem:[#allocation7 + $0x24] sm:$0xf] %v611
    %644 = vst [vmem:[#allocation7 + $0x28] sm:$0xf] %v612
    %645 = vst [vmem:[#allocation7 + $0x2c] sm:$0xf] %v613
    %646 = vst [vmem:[#allocation7 + $0x30] sm:$0xf] %v614
    %647 = vst [vmem:[#allocation7 + $0x34] sm:$0xf] %v615
    %648 = vst [vmem:[#allocation7 + $0x38] sm:$0xf] %v616
    %649 = vst [vmem:[#allocation7 + $0x3c] sm:$0xf] %v617
    // Predicated region
    $region30: #{tpu_custom_call.1} parent=1 // pred_check
      _
    $region31: #{tpu_custom_call.1} parent=1 // pred_check_branch
      %651 = sbr.rel (0) target = $region33
    $region32: #{tpu_custom_call.1} parent=1 // pred_region
      %s653 = ssub.s32 1024, 1024
      %654 = vsyncadd [#allocation4], %s653
      %s655 = sshll.u32 [#allocation7], 4
      %s656 = int_to_ptr.vmem [resolvable:$true] %s655
      %661 = dma.vmem_to_hbm [thread:$0]  %s656, 1024, %s5, [#allocation4], 64, 64, 4
    $region33: #{tpu_custom_call.1} parent=1 // pred_fallthru
      _
    // Predicated region
    $region34: #{tpu_custom_call.1} parent=1 // pred_check
      _
    $region35: #{tpu_custom_call.1} parent=1 // pred_check_branch
      %663 = sbr.rel (0) target = $region37
    $region36: #{tpu_custom_call.1} parent=1 // pred_region
      %664 = dma.done [#allocation4], 1024
    $region37: #{tpu_custom_call.1} parent=1 // pred_fallthru
      _
    %665 = vsyncpa [#allocation3], 1
    %666 = vsyncpa [#allocation6], 1
    %667 = vsyncpa [#allocation4], 1

</llo_original>
